<compile_context>
chip_gen: v7x
topology: tpu7x:2x2x1
jax: 0.10.0
libtpu: 0.0.40
codegen_flags: <defaults>
</compile_context>

<pallas_src>
import functools

import jax
import jax.numpy as jnp
from jax.experimental import pallas as pl
from jax.experimental.pallas import tpu as pltpu

IN_FEATURES = 10
OUT_FEATURES = 20
N_PAD = 128          # lane-dense output width
TM_MAX = 128         # max batch tile


def linear_relu_kernel(x_ref, w_ref, b_ref, o_ref):
    # One MXU pass + VPU bias-add + ReLU per (TM, N_PAD) output tile.
    y = jnp.dot(x_ref[...], w_ref[...], preferred_element_type=jnp.float32)
    y = y + b_ref[...]                       # (TM, N_PAD) + (1, N_PAD)
    o_ref[...] = jnp.maximum(y, 0.0).astype(o_ref.dtype)


def _round_up(v, m):
    return -(-v // m) * m


@functools.partial(jax.jit, static_argnames=("out_features",))
def linear_relu(x, w_kn, b_1n, *, out_features):
    """x: (M, K) f32; w_kn: (K, N_PAD) f32; b_1n: (1, N_PAD) f32 -> (M, out_features)."""
    M, K = x.shape
    Kw, Np = w_kn.shape
    assert K == Kw and b_1n.shape == (1, Np) and Np % 128 == 0

    # Pad batch to a sublane multiple; pick a batch tile and a 1-D grid over it.
    M_pad = _round_up(max(M, 8), 8)
    tm = min(TM_MAX, M_pad)
    M_pad = _round_up(M_pad, tm)
    if M_pad != M:
        x = jnp.pad(x, ((0, M_pad - M), (0, 0)))

    grid = (M_pad // tm,)

    out = pl.pallas_call(
        linear_relu_kernel,
        out_shape=jax.ShapeDtypeStruct((M_pad, Np), jnp.float32),
        grid=grid,
        in_specs=[
            pl.BlockSpec((tm, K), lambda i: (i, 0)),   # x tile streams over batch
            pl.BlockSpec((K, Np), lambda i: (0, 0)),   # weight: resident in VMEM
            pl.BlockSpec((1, Np), lambda i: (0, 0)),   # bias:   resident in VMEM
        ],
        out_specs=pl.BlockSpec((tm, Np), lambda i: (i, 0)),
        compiler_params=pltpu.CompilerParams(
            dimension_semantics=("parallel",),         # shards across TCs on v7x
        ),
    )(x, w_kn, b_1n)

    return out[:M, :out_features]


if __name__ == "__main__":
    key = jax.random.PRNGKey(0)
    kx, kw, kb = jax.random.split(key, 3)

    # Input, matches torch.randn(10, 10)
    x = jax.random.normal(kx, (10, IN_FEATURES), dtype=jnp.float32)

    # Deterministic parameter init mirroring nn.Linear's U(-1/sqrt(fan_in), ...)
    bound = 1.0 / (IN_FEATURES ** 0.5)
    w = jax.random.uniform(kw, (OUT_FEATURES, IN_FEATURES),
                           minval=-bound, maxval=bound, dtype=jnp.float32)
    b = jax.random.uniform(kb, (OUT_FEATURES,),
                           minval=-bound, maxval=bound, dtype=jnp.float32)

    # One-time packing into lane-dense kernel layout (no per-call transpose).
    w_kn = jnp.zeros((IN_FEATURES, N_PAD), jnp.float32).at[:, :OUT_FEATURES].set(w.T)
    b_1n = jnp.zeros((1, N_PAD), jnp.float32).at[:, :OUT_FEATURES].set(b)

    out = linear_relu(x, w_kn, b_1n, out_features=OUT_FEATURES)
    jax.block_until_ready(out)

    # Reference check in plain JAX
    ref = jnp.maximum(x @ w.T + b, 0.0)
    assert out.shape == (10, OUT_FEATURES)
    assert jnp.allclose(out, ref, atol=1e-5, rtol=1e-5)

    print("KERNEL_OK")
</pallas_src>

<mosaic_0001>
module attributes {stable_mosaic.version = 11 : i64} {
  func.func @linear_relu_kernel(%arg0: i32, %arg1: memref<16x10xf32, #tpu.memory_space<vmem>>, %arg2: memref<10x128xf32, #tpu.memory_space<vmem>>, %arg3: memref<1x128xf32, #tpu.memory_space<vmem>>, %arg4: memref<16x128xf32, #tpu.memory_space<vmem>>) attributes {dimension_semantics = [#tpu.dimension_semantics<parallel>], iteration_bounds = array<i64: 1>, scalar_prefetch = 0 : i64, scratch_operands = 0 : i64, tpu.core_type = #tpu.core_type<tc>, window_params = [{transform_indices = @transform_0, window_bounds = array<i64: 16, 10>}, {pipeline_mode = #tpu.pipeline_mode<synchronous>, transform_indices = @transform_1, window_bounds = array<i64: 10, 128>}, {pipeline_mode = #tpu.pipeline_mode<synchronous>, transform_indices = @transform_2, window_bounds = array<i64: 1, 128>}, {transform_indices = @transform_3, window_bounds = array<i64: 16, 128>}]} {
    %c0 = arith.constant 0 : index
    %c0_0 = arith.constant 0 : index
    %0 = vector.load %arg1[%c0, %c0_0] : memref<16x10xf32, #tpu.memory_space<vmem>>, vector<16x10xf32>
    %c0_1 = arith.constant 0 : index
    %c0_2 = arith.constant 0 : index
    %1 = vector.load %arg2[%c0_1, %c0_2] : memref<10x128xf32, #tpu.memory_space<vmem>>, vector<10x128xf32>
    %cst = arith.constant dense<0.000000e+00> : vector<16x128xf32>
    %2 = tpu.matmul %0, %1, %cst {dimension_numbers = #tpu.dot_dimension_numbers<[1], [0], [0], [1], [0, 0, 1, 1], [], []>} : vector<16x10xf32>, vector<10x128xf32>, vector<16x128xf32> -> vector<16x128xf32>
    %c0_3 = arith.constant 0 : index
    %c0_4 = arith.constant 0 : index
    %3 = vector.load %arg3[%c0_3, %c0_4] : memref<1x128xf32, #tpu.memory_space<vmem>>, vector<1x128xf32>
    %4 = vector.broadcast %3 : vector<1x128xf32> to vector<16x128xf32>
    %5 = arith.addf %2, %4 : vector<16x128xf32>
    %cst_5 = arith.constant 0.000000e+00 : f32
    %6 = vector.broadcast %cst_5 : f32 to vector<16x128xf32>
    %7 = arith.maximumf %5, %6 : vector<16x128xf32>
    %c0_6 = arith.constant 0 : index
    %c0_7 = arith.constant 0 : index
    %8 = vector.load %arg4[%c0_6, %c0_7] : memref<16x128xf32, #tpu.memory_space<vmem>>, vector<16x128xf32>
    tpu.vector_store %arg4[%c0_6, %c0_7], %7 {strides = array<i32>} : memref<16x128xf32, #tpu.memory_space<vmem>>, vector<16x128xf32>,
    return
  }
  func.func @transform_0(%arg0: i32) -> (i32, i32) {
    %c0_i32 = arith.constant 0 : i32
    %c0_i32_0 = arith.constant 0 : i32
    return %arg0, %c0_i32 : i32, i32
  }
  func.func @transform_1(%arg0: i32) -> (i32, i32) {
    %c0_i32 = arith.constant 0 : i32
    %c0_i32_0 = arith.constant 0 : i32
    %c0_i32_1 = arith.constant 0 : i32
    return %c0_i32, %c0_i32_0 : i32, i32
  }
  func.func @transform_2(%arg0: i32) -> (i32, i32) {
    %c0_i32 = arith.constant 0 : i32
    %c0_i32_0 = arith.constant 0 : i32
    %c0_i32_1 = arith.constant 0 : i32
    return %c0_i32, %c0_i32_0 : i32, i32
  }
  func.func @transform_3(%arg0: i32) -> (i32, i32) {
    %c0_i32 = arith.constant 0 : i32
    %c0_i32_0 = arith.constant 0 : i32
    return %arg0, %c0_i32 : i32, i32
  }
}

</mosaic_0001>

<llo_original>
// kernel: linear_relu.1
$region0: #{linear_relu.1}
  #allocation0 [shape = 'u32[]', space=smem, size = 0x4, offset = 0x4, fixed_abs, tag = 'smem constant byte address 0x4 - core index']
  #allocation1 [shape = 'u32[144,128]{1,0:T(1,128)}', space=vmem, size = 0x12000, scoped, tag = 'internal scratch']
  %s0 = inlined_call_operand.vmem [shape: f32[16,10], index: 0, kind: input, shape index: {}]
  %s1 = inlined_call_operand.vmem [shape: f32[10,128], index: 1, kind: input, shape index: {}]
  %s2 = inlined_call_operand.vmem [shape: f32[1,128], index: 2, kind: input, shape index: {}]
  %s3 = inlined_call_operand.hbm [shape: f32[16,128], index: 3, kind: output, shape index: {}]
  %s4 = sld [smem:[#allocation0]]
  $region22: #{linear_relu.1} parent=0
    _
  %s6 = ssub.s32 1, %s4
  %s7 = scalar_select 0, %s6, %s4
  $region1: #{linear_relu.1} parent=0
    #allocation2 [shape = 'u8[8192]{0}', space=vmem, size = 0x2000, scoped, tag = 'output window, operand 0, single buffered']
    #allocation3 [shape = 's32[1]{0}', space=sflag, size = 0x4, scoped, tag = 'scoped memory for linear_relu.1']
    %8 = vsyncpa [#allocation3], 0
    // Predicated region
    $region2: #{linear_relu.1} parent=1 // pred_check
      _
    $region3: #{linear_relu.1} parent=1 // pred_check_branch
      %10 = sbr.rel (0) target = $region5
    $region4: #{linear_relu.1} parent=1 // pred_region
      _
    $region5: #{linear_relu.1} parent=1 // pred_fallthru
      _
    // Predicated region
    $region6: #{linear_relu.1} parent=1 // pred_check
      _
    $region7: #{linear_relu.1} parent=1 // pred_check_branch
      %12 = sbr.rel (0) target = $region9
    $region8: #{linear_relu.1} parent=1 // pred_region
      _
    $region9: #{linear_relu.1} parent=1 // pred_fallthru
      _
    // Predicated region
    $region10: #{linear_relu.1} parent=1 // pred_check
      _
    $region11: #{linear_relu.1} parent=1 // pred_check_branch
      %14 = sbr.rel (0) target = $region13
    $region12: #{linear_relu.1} parent=1 // pred_region
      _
    $region13: #{linear_relu.1} parent=1 // pred_fallthru
      _
    %v15 = vld [vmem:[%s0] sm:$0xff]
    %v16 = vld [vmem:[%s0 + $0x8] sm:$0xff]
    %v17 = vld [vmem:[%s1] sm:$0xff]
    %v18 = vld [vmem:[%s1 + $0x8] sm:$0x3]
    %v19 = vld [vmem:[%s2] sm:$0x1]
    %v21 = vlaneseq
    %v22 = vshrl.u32 %v21, 7
    %v23 = vsub.s32 0, %v22
    %v24 = vrot.slane %v19, %v23
    %vm26 = vcmask 80896
    %v28 = vsel %vm26, %v15, 0
    %v31 = vsel %vm26, %v16, 0
    %vm33 = vcmask 1041408
    %v35 = vsel %vm33, %v18, 0
    %37 = vmatprep.subr.mxu0 0.0
    %38 = vmatpush1.msra.mxu0 %v17
    %39 = vmatprep.subr.mxu0 0.0
    %40 = vmatpush1.msra.mxu0 %v35
    %41 = vmatprep.subr.mxu0 0.0
    %42 = vmatpush1.msra.mxu0 0.0
    %43 = vmatprep.subr.mxu0 0.0
    %44 = vmatpush1.msra.mxu0 0.0
    %45 = vmatprep.subr.mxu0 0.0
    %46 = vmatpush1.msra.mxu0 0.0
    %47 = vmatprep.subr.mxu0 0.0
    %48 = vmatpush1.msra.mxu0 0.0
    %49 = vmatprep.subr.mxu0 0.0
    %50 = vmatpush1.msra.mxu0 0.0
    %51 = vmatprep.subr.mxu0 0.0
    %52 = vmatpush1.msra.mxu0 0.0
    %53 = vmatprep.subr.mxu0 0.0
    %54 = vmatpush1.msra.mxu0 0.0
    %55 = vmatprep.subr.mxu0 0.0
    %56 = vmatpush1.msra.mxu0 0.0
    %57 = vmatprep.subr.mxu0 0.0
    %58 = vmatpush1.msra.mxu0 0.0
    %59 = vmatprep.subr.mxu0 0.0
    %60 = vmatpush1.msra.mxu0 0.0
    %61 = vmatprep.subr.mxu0 0.0
    %62 = vmatpush1.msra.mxu0 0.0
    %63 = vmatprep.subr.mxu0 0.0
    %64 = vmatpush1.msra.mxu0 0.0
    %65 = vmatprep.subr.mxu0 0.0
    %66 = vmatpush1.msra.mxu0 0.0
    %67 = vmatprep.subr.mxu0 0.0
    %68 = vmatpush1.msra.mxu0 0.0
    %69 = vmatprep.subr.mxu0 0.0
    %70 = vmatpush1.msra.mxu0 0.0
    %71 = vmatprep.subr.mxu0 0.0
    %72 = vmatpush1.msra.mxu0 0.0
    %73 = vmatprep.subr.mxu0 0.0
    %74 = vmatpush1.msra.mxu0 0.0
    %75 = vmatprep.subr.mxu0 0.0
    %76 = vmatpush1.msra.mxu0 0.0
    %77 = vmatprep.subr.mxu0 0.0
    %78 = vmatpush1.msra.mxu0 0.0
    %79 = vmatprep.subr.mxu0 0.0
    %80 = vmatpush1.msra.mxu0 0.0
    %81 = vmatprep.subr.mxu0 0.0
    %82 = vmatpush1.msra.mxu0 0.0
    %83 = vmatprep.subr.mxu0 0.0
    %84 = vmatpush1.msra.mxu0 0.0
    %85 = vmatprep.subr.mxu0 0.0
    %86 = vmatpush1.msra.mxu0 0.0
    %87 = vmatprep.subr.mxu0 0.0
    %88 = vmatpush1.msra.mxu0 0.0
    %89 = vmatprep.subr.mxu0 0.0
    %90 = vmatpush1.msra.mxu0 0.0
    %91 = vmatprep.subr.mxu0 0.0
    %92 = vmatpush1.msra.mxu0 0.0
    %93 = vmatprep.subr.mxu0 0.0
    %94 = vmatpush1.msra.mxu0 0.0
    %95 = vmatprep.subr.mxu0 0.0
    %96 = vmatpush1.msra.mxu0 0.0
    %97 = vmatprep.subr.mxu0 0.0
    %98 = vmatpush1.msra.mxu0 0.0
    %99 = vmatprep.subr.mxu0 0.0
    %100 = vmatpush1.msra.mxu0 0.0
    %101 = vmatprep.mubr.f32.mxu0 0.0
    %102 = vmatmul.mubr.f32.gmra.mrb[0].mxu0 %v28
    %v103 = vpop.f32.mrb[0].mxu0
    %v104 = vadd.f32 %v24, %v103
    %v105 = vpop.f32.mrb[0].mxu0
    %106 = vmatprep.mubr.f32.mxu0 0.0
    %107 = vmatmul.mubr.f32.gmra.mrb[0].mxu0 %v31
    %v108 = vpop.f32.mrb[0].mxu0
    %v109 = vadd.f32 %v24, %v108
    %v110 = vpop.f32.mrb[0].mxu0
    %111 = vdwg.mxu0
    %v112 = vmax.f32 %v104, 0.0
    %v113 = vmax.f32 %v109, 0.0
    %114 = vst [vmem:[#allocation2] sm:$0xff] %v112
    %115 = vst [vmem:[#allocation2 + $0x8] sm:$0xff] %v113
    // Predicated region
    $region14: #{linear_relu.1} parent=1 // pred_check
      _
    $region15: #{linear_relu.1} parent=1 // pred_check_branch
      %117 = sbr.rel (0) target = $region17
    $region16: #{linear_relu.1} parent=1 // pred_region
      %s119 = ssub.s32 256, 256
      %120 = vsyncadd [#allocation3], %s119
      %s121 = sshll.u32 [#allocation2], 4
      %s122 = int_to_ptr.vmem [resolvable:$true] %s121
      %127 = dma.vmem_to_hbm [thread:$0]  %s122, 256, %s3, [#allocation3], 128, 128, 8
    $region17: #{linear_relu.1} parent=1 // pred_fallthru
      _
    // Predicated region
    $region18: #{linear_relu.1} parent=1 // pred_check
      _
    $region19: #{linear_relu.1} parent=1 // pred_check_branch
      %129 = sbr.rel (0) target = $region21
    $region20: #{linear_relu.1} parent=1 // pred_region
      %130 = dma.done [#allocation3], 256
    $region21: #{linear_relu.1} parent=1 // pred_fallthru
      _
    %131 = vsyncpa [#allocation3], 1

</llo_original>
